<compile_context>
chip_gen: v7x
topology: tpu7x:2x2x1
jax: 0.10.0
libtpu: 0.0.40
codegen_flags: <defaults>
</compile_context>

<pallas_src>
import functools

import jax
import jax.numpy as jnp
from jax.experimental import pallas as pl
from jax.experimental.pallas import tpu as pltpu


def _layernorm_kernel(x_ref, gb_ref, o_ref, *, epsilon: float, inv_nm1: float):
    # x_ref: (block_rows, hidden); gb_ref: (2, hidden) = [gamma; beta]
    x = x_ref[...].astype(jnp.float32)

    mean = jnp.mean(x, axis=-1, keepdims=True)
    diff = x - mean
    # torch.var default is unbiased (ddof=1): sum(diff^2) / (N - 1).
    # 1/(N-1) is folded into a compile-time constant multiply (no runtime divide).
    var = jnp.sum(diff * diff, axis=-1, keepdims=True) * jnp.float32(inv_nm1)
    inv_std = jax.lax.rsqrt(var + jnp.float32(epsilon))  # EUP path

    gamma = gb_ref[0:1, :].astype(jnp.float32)
    beta = gb_ref[1:2, :].astype(jnp.float32)

    o_ref[...] = (gamma * (diff * inv_std) + beta).astype(o_ref.dtype)


def _round_up(n: int, m: int) -> int:
    return ((n + m - 1) // m) * m


def layer_normalization(x: jax.Array,
                        gamma: jax.Array,
                        beta: jax.Array,
                        epsilon: float = 1e-05,
                        block_rows: int = 1024) -> jax.Array:
    """LayerNorm over the last axis, matching the PyTorch module's forward
    (unbiased variance, as torch.var defaults to ddof=1)."""
    orig_shape = x.shape
    hidden = orig_shape[-1]
    assert gamma.shape == (hidden,) and beta.shape == (hidden,)

    # Flatten leading dims into independent rows.
    rows = 1
    for d in orig_shape[:-1]:
        rows *= d
    x2d = x.reshape(rows, hidden)
    # Fuse gamma/beta into one (2, hidden) VMEM-resident block (single extra input).
    gb = jnp.concatenate([gamma.reshape(1, hidden), beta.reshape(1, hidden)], axis=0)

    itemsize = jnp.dtype(x.dtype).itemsize
    # Sublane packing: 8 rows/vreg for 4-byte, 16 for 2-byte, 32 for 1-byte dtypes.
    sublane = {4: 8, 2: 16, 1: 32}.get(itemsize, 8)

    # Pick a large tile, clamped to (a) the actual row count and (b) a VMEM-safe
    # tile size (~8 MiB per tile => <= ~40 MiB total with double-buffered in+out,
    # which still fits the 64 MiB-per-TC budget on v7x).
    max_tile_bytes = 8 * 1024 * 1024
    rows_by_vmem = max(sublane, (max_tile_bytes // max(1, hidden * itemsize)) // sublane * sublane)
    br = min(block_rows, _round_up(rows, sublane), rows_by_vmem)
    br = max(sublane, _round_up(br, sublane))

    grid = (pl.cdiv(rows, br),)  # padded tail block is harmless: rows are independent
    tile_bytes = br * hidden * itemsize
    # 2 tiles (x in + out), each double-buffered, plus gamma/beta and slack.
    vmem_limit = int(min(48 * 1024 * 1024, max(16 * 1024 * 1024, 5 * tile_bytes)))

    inv_nm1 = 1.0 / float(max(hidden - 1, 1))

    out2d = pl.pallas_call(
        functools.partial(_layernorm_kernel, epsilon=epsilon, inv_nm1=inv_nm1),
        out_shape=jax.ShapeDtypeStruct((rows, hidden), x.dtype),
        grid_spec=pltpu.PrefetchScalarGridSpec(
            num_scalar_prefetch=0,
            grid=grid,
            in_specs=[
                pl.BlockSpec((br, hidden), lambda i: (i, 0)),
                pl.BlockSpec((2, hidden), lambda i: (0, 0)),
            ],
            out_specs=pl.BlockSpec((br, hidden), lambda i: (i, 0)),
        ),
        compiler_params=pltpu.CompilerParams(
            dimension_semantics=("parallel",),
            vmem_limit_bytes=vmem_limit),
    )(x2d, gb)

    return out2d.reshape(orig_shape)


def _reference_layernorm(x, gamma, beta, epsilon):
    # Pure-JAX reference reproducing torch semantics (unbiased variance, ddof=1).
    mean = jnp.mean(x, axis=-1, keepdims=True)
    var = jnp.var(x, axis=-1, keepdims=True, ddof=1)
    return gamma * (x - mean) / jnp.sqrt(var + epsilon) + beta


if __name__ == "__main__":
    normalized_shape = 512   # module default
    epsilon = 1e-05
    batch, seq = 2, 8

    key = jax.random.PRNGKey(0)
    x = jax.random.normal(key, (batch, seq, normalized_shape), dtype=jnp.float32)

    # nn.Parameter(torch.ones/zeros) init
    gamma = jnp.ones((normalized_shape,), dtype=jnp.float32)
    beta = jnp.zeros((normalized_shape,), dtype=jnp.float32)

    out = layer_normalization(x, gamma, beta, epsilon=epsilon)
    out = jax.block_until_ready(out)

    ref = _reference_layernorm(x, gamma, beta, epsilon)
    assert out.shape == x.shape
    assert jnp.allclose(out, ref, atol=1e-5, rtol=1e-5), "mismatch vs reference"

    print("KERNEL_OK")
</pallas_src>

<mosaic_0001>
module attributes {stable_mosaic.version = 11 : i64} {
  func.func @_layernorm_kernel(%arg0: i32, %arg1: memref<16x512xf32, #tpu.memory_space<vmem>>, %arg2: memref<2x512xf32, #tpu.memory_space<vmem>>, %arg3: memref<16x512xf32, #tpu.memory_space<vmem>>) attributes {dimension_semantics = [#tpu.dimension_semantics<parallel>], iteration_bounds = array<i64: 1>, scalar_prefetch = 0 : i64, scratch_operands = 0 : i64, tpu.core_type = #tpu.core_type<tc>, window_params = [{transform_indices = @transform_0, window_bounds = array<i64: 16, 512>}, {pipeline_mode = #tpu.pipeline_mode<synchronous>, transform_indices = @transform_1, window_bounds = array<i64: 2, 512>}, {transform_indices = @transform_2, window_bounds = array<i64: 16, 512>}]} {
    %c0 = arith.constant 0 : index
    %c0_0 = arith.constant 0 : index
    %0 = vector.load %arg1[%c0, %c0_0] : memref<16x512xf32, #tpu.memory_space<vmem>>, vector<16x512xf32>
    %cst = arith.constant dense<0.000000e+00> : vector<16xf32>
    %1 = vector.multi_reduction <add>, %0, %cst [1] : vector<16x512xf32> to vector<16xf32>
    %2 = vector.shape_cast %1 : vector<16xf32> to vector<16x1xf32>
    %cst_1 = arith.constant 5.120000e+02 : f32
    %3 = vector.broadcast %cst_1 : f32 to vector<16x1xf32>
    %4 = arith.divf %2, %3 : vector<16x1xf32>
    %5 = vector.broadcast %4 : vector<16x1xf32> to vector<16x512xf32>
    %6 = arith.subf %0, %5 : vector<16x512xf32>
    %7 = arith.mulf %6, %6 : vector<16x512xf32>
    %cst_2 = arith.constant dense<0.000000e+00> : vector<16xf32>
    %8 = vector.multi_reduction <add>, %7, %cst_2 [1] : vector<16x512xf32> to vector<16xf32>
    %9 = vector.shape_cast %8 : vector<16xf32> to vector<16x1xf32>
    %cst_3 = arith.constant 0.00195694715 : f32
    %10 = vector.broadcast %cst_3 : f32 to vector<16x1xf32>
    %11 = arith.mulf %9, %10 : vector<16x1xf32>
    %cst_4 = arith.constant 9.99999974E-6 : f32
    %12 = vector.broadcast %cst_4 : f32 to vector<16x1xf32>
    %13 = arith.addf %11, %12 : vector<16x1xf32>
    %14 = math.rsqrt %13 : vector<16x1xf32>
    %c0_5 = arith.constant 0 : index
    %c0_6 = arith.constant 0 : index
    %15 = vector.load %arg2[%c0_5, %c0_6] : memref<2x512xf32, #tpu.memory_space<vmem>>, vector<1x512xf32>
    %c1 = arith.constant 1 : index
    %c0_7 = arith.constant 0 : index
    %16 = vector.load %arg2[%c1, %c0_7] : memref<2x512xf32, #tpu.memory_space<vmem>>, vector<1x512xf32>
    %17 = vector.broadcast %14 : vector<16x1xf32> to vector<16x512xf32>
    %18 = arith.mulf %6, %17 : vector<16x512xf32>
    %19 = vector.broadcast %15 : vector<1x512xf32> to vector<16x512xf32>
    %20 = arith.mulf %19, %18 : vector<16x512xf32>
    %21 = vector.broadcast %16 : vector<1x512xf32> to vector<16x512xf32>
    %22 = arith.addf %20, %21 : vector<16x512xf32>
    %c0_8 = arith.constant 0 : index
    %c0_9 = arith.constant 0 : index
    %23 = vector.load %arg3[%c0_8, %c0_9] : memref<16x512xf32, #tpu.memory_space<vmem>>, vector<16x512xf32>
    tpu.vector_store %arg3[%c0_8, %c0_9], %22 {strides = array<i32>} : memref<16x512xf32, #tpu.memory_space<vmem>>, vector<16x512xf32>,
    return
  }
  func.func @transform_0(%arg0: i32) -> (i32, i32) {
    %c0_i32 = arith.constant 0 : i32
    %c0_i32_0 = arith.constant 0 : i32
    return %arg0, %c0_i32 : i32, i32
  }
  func.func @transform_1(%arg0: i32) -> (i32, i32) {
    %c0_i32 = arith.constant 0 : i32
    %c0_i32_0 = arith.constant 0 : i32
    %c0_i32_1 = arith.constant 0 : i32
    return %c0_i32, %c0_i32_0 : i32, i32
  }
  func.func @transform_2(%arg0: i32) -> (i32, i32) {
    %c0_i32 = arith.constant 0 : i32
    %c0_i32_0 = arith.constant 0 : i32
    return %arg0, %c0_i32 : i32, i32
  }
}

</mosaic_0001>

<llo_original>
// kernel: tpu_custom_call.1
$region0: #{tpu_custom_call.1}
  #allocation0 [shape = 'u32[]', space=smem, size = 0x4, offset = 0x4, fixed_abs, tag = 'smem constant byte address 0x4 - core index']
  #allocation1 [shape = 'u32[144,128]{1,0:T(1,128)}', space=vmem, size = 0x12000, scoped, tag = 'internal scratch']
  %s0 = inlined_call_operand.hbm [shape: f32[16,512], index: 0, kind: input, shape index: {}]
  %s1 = inlined_call_operand.hbm [shape: f32[2,512], index: 1, kind: input, shape index: {}]
  %s2 = inlined_call_operand.hbm [shape: f32[16,512], index: 2, kind: output, shape index: {}]
  %s3 = sld [smem:[#allocation0]]
  $region26: #{tpu_custom_call.1} parent=0
    _
  %s5 = ssub.s32 1, %s3
  %s6 = scalar_select 0, %s5, %s3
  $region1: #{tpu_custom_call.1} parent=0
    #allocation2 [shape = 'u8[32768]{0}', space=vmem, size = 0x8000, scoped, tag = 'input window, operand 0, single buffered']
    #allocation3 [shape = 's32[1]{0}', space=sflag, size = 0x4, scoped, tag = 'scoped memory for tpu_custom_call.1']
    #allocation4 [shape = 's32[1]{0}', space=sflag, size = 0x4, scoped, tag = 'scoped memory for tpu_custom_call.1']
    #allocation5 [shape = 'u8[4096]{0}', space=vmem, size = 0x1000, scoped, tag = 'input window, operand 1, single buffered']
    #allocation6 [shape = 's32[1]{0}', space=sflag, size = 0x4, scoped, tag = 'scoped memory for tpu_custom_call.1']
    #allocation7 [shape = 'u8[32768]{0}', space=vmem, size = 0x8000, scoped, tag = 'output window, operand 0, single buffered']
    %7 = vsyncpa [#allocation3], 0
    %8 = vsyncpa [#allocation6], 0
    %9 = vsyncpa [#allocation4], 0
    // Predicated region
    $region2: #{tpu_custom_call.1} parent=1 // pred_check
      _
    $region3: #{tpu_custom_call.1} parent=1 // pred_check_branch
      %11 = sbr.rel (0) target = $region5
    $region4: #{tpu_custom_call.1} parent=1 // pred_region
      %s13 = ssub.s32 1024, 1024
      %14 = vsyncadd [#allocation3], %s13
      %s15 = sshll.u32 [#allocation2], 4
      %s16 = int_to_ptr.vmem [resolvable:$true] %s15
      %21 = dma.hbm_to_vmem [thread:$0]  %s0, 1024, %s16, [#allocation3], 512, 512, 32
    $region5: #{tpu_custom_call.1} parent=1 // pred_fallthru
      _
    // Predicated region
    $region6: #{tpu_custom_call.1} parent=1 // pred_check
      _
    $region7: #{tpu_custom_call.1} parent=1 // pred_check_branch
      %23 = sbr.rel (0) target = $region9
    $region8: #{tpu_custom_call.1} parent=1 // pred_region
      %s25 = ssub.s32 128, 128
      %26 = vsyncadd [#allocation6], %s25
      %s28 = sshll.u32 [#allocation5], 4
      %s29 = int_to_ptr.vmem [resolvable:$true] %s28
      %31 = dma.hbm_to_vmem [thread:$0]  %s1, 128, %s29, [#allocation6]
    $region9: #{tpu_custom_call.1} parent=1 // pred_fallthru
      _
    // Predicated region
    $region10: #{tpu_custom_call.1} parent=1 // pred_check
      _
    $region11: #{tpu_custom_call.1} parent=1 // pred_check_branch
      %33 = sbr.rel (0) target = $region13
    $region12: #{tpu_custom_call.1} parent=1 // pred_region
      %34 = dma.done [#allocation3], 1024
    $region13: #{tpu_custom_call.1} parent=1 // pred_fallthru
      _
    // Predicated region
    $region14: #{tpu_custom_call.1} parent=1 // pred_check
      _
    $region15: #{tpu_custom_call.1} parent=1 // pred_check_branch
      %36 = sbr.rel (0) target = $region17
    $region16: #{tpu_custom_call.1} parent=1 // pred_region
      %37 = dma.done [#allocation6], 128
    $region17: #{tpu_custom_call.1} parent=1 // pred_fallthru
      _
    %v38 = vld [vmem:[#allocation2] sm:$0xff]
    %v39 = vld [vmem:[#allocation2 + $0x8] sm:$0xff]
    %v40 = vld [vmem:[#allocation2 + $0x10] sm:$0xff]
    %v41 = vld [vmem:[#allocation2 + $0x18] sm:$0xff]
    %v42 = vld [vmem:[#allocation2 + $0x20] sm:$0xff]
    %v43 = vld [vmem:[#allocation2 + $0x28] sm:$0xff]
    %v44 = vld [vmem:[#allocation2 + $0x30] sm:$0xff]
    %v45 = vld [vmem:[#allocation2 + $0x38] sm:$0xff]
    %v46 = vadd.f32 %v38, %v39
    %v47 = vadd.f32 %v46, %v40
    %v48 = vadd.f32 %v47, %v41
    %49 = vadd.xlane.f32.xlu0 %v48
    %v50 = vpop.xlane.xlu0 %49
    %v51 = vadd.f32 %v42, %v43
    %v52 = vadd.f32 %v51, %v44
    %v53 = vadd.f32 %v52, %v45
    %54 = vadd.xlane.f32.xlu0 %v53
    %v55 = vpop.xlane.xlu0 %54
    %v56 = vrcp.pop 512.0
    %v57 = vmul.f32 %v50, %v56
    %v58 = vmul.f32 %v55, %v56
    %v59 = vsub.f32 %v38, %v57
    %v60 = vsub.f32 %v39, %v57
    %v61 = vsub.f32 %v40, %v57
    %v62 = vsub.f32 %v41, %v57
    %v63 = vsub.f32 %v42, %v58
    %v64 = vsub.f32 %v43, %v58
    %v65 = vsub.f32 %v44, %v58
    %v66 = vsub.f32 %v45, %v58
    %v67 = vmul.f32 %v59, %v59
    %v68 = vmul.f32 %v60, %v60
    %v69 = vmul.f32 %v61, %v61
    %v70 = vmul.f32 %v62, %v62
    %v71 = vmul.f32 %v63, %v63
    %v72 = vmul.f32 %v64, %v64
    %v73 = vmul.f32 %v65, %v65
    %v74 = vmul.f32 %v66, %v66
    %v75 = vadd.f32 %v67, %v68
    %v76 = vadd.f32 %v75, %v69
    %v77 = vadd.f32 %v76, %v70
    %78 = vadd.xlane.f32.xlu0 %v77
    %v79 = vpop.xlane.xlu0 %78
    %v80 = vadd.f32 %v71, %v72
    %v81 = vadd.f32 %v80, %v73
    %v82 = vadd.f32 %v81, %v74
    %83 = vadd.xlane.f32.xlu0 %v82
    %v84 = vpop.xlane.xlu0 %83
    %v85 = vmul.f32 %v79, 0.0019569471
    %v86 = vmul.f32 %v84, 0.0019569471
    %v87 = vadd.f32 %v85, 1e-05
    %v88 = vadd.f32 %v86, 1e-05
    %v89 = vrsqrt.pop %v87
    %v90 = vrsqrt.pop %v88
    %v91 = vld [vmem:[#allocation5] ss:$2 sm:$0xf]
    %s92 = scalar_lea.vmem [#allocation5], 1
    %v93 = vld [vmem:[%s92] ss:$2 sm:$0xf]
    %v94 = vmul.f32 %v59, %v89
    %v95 = vmul.f32 %v60, %v89
    %v96 = vmul.f32 %v61, %v89
    %v97 = vmul.f32 %v62, %v89
    %v98 = vmul.f32 %v63, %v90
    %v99 = vmul.f32 %v64, %v90
    %v100 = vmul.f32 %v65, %v90
    %v101 = vmul.f32 %v66, %v90
    %v103 = vlaneseq
    %v104 = vshrl.u32 %v103, 7
    %v105 = vsub.s32 0, %v104
    %v106 = vrot.slane %v91, %v105
    %v107 = vlaneseq
    %v108 = vshrl.u32 %v107, 7
    %v109 = vsub.s32 1, %v108
    %v110 = vrot.slane %v91, %v109
    %v111 = vlaneseq
    %v112 = vshrl.u32 %v111, 7
    %v113 = vsub.s32 2, %v112
    %v114 = vrot.slane %v91, %v113
    %v115 = vlaneseq
    %v116 = vshrl.u32 %v115, 7
    %v117 = vsub.s32 3, %v116
    %v118 = vrot.slane %v91, %v117
    %v123 = vmul.f32 %v106, %v94
    %v124 = vmul.f32 %v110, %v95
    %v125 = vmul.f32 %v114, %v96
    %v126 = vmul.f32 %v118, %v97
    %v127 = vmul.f32 %v106, %v98
    %v128 = vmul.f32 %v110, %v99
    %v129 = vmul.f32 %v114, %v100
    %v130 = vmul.f32 %v118, %v101
    %v132 = vlaneseq
    %v133 = vshrl.u32 %v132, 7
    %v134 = vsub.s32 0, %v133
    %v135 = vrot.slane %v93, %v134
    %v136 = vlaneseq
    %v137 = vshrl.u32 %v136, 7
    %v138 = vsub.s32 1, %v137
    %v139 = vrot.slane %v93, %v138
    %v140 = vlaneseq
    %v141 = vshrl.u32 %v140, 7
    %v142 = vsub.s32 2, %v141
    %v143 = vrot.slane %v93, %v142
    %v144 = vlaneseq
    %v145 = vshrl.u32 %v144, 7
    %v146 = vsub.s32 3, %v145
    %v147 = vrot.slane %v93, %v146
    %v152 = vadd.f32 %v123, %v135
    %v153 = vadd.f32 %v124, %v139
    %v154 = vadd.f32 %v125, %v143
    %v155 = vadd.f32 %v126, %v147
    %v156 = vadd.f32 %v127, %v135
    %v157 = vadd.f32 %v128, %v139
    %v158 = vadd.f32 %v129, %v143
    %v159 = vadd.f32 %v130, %v147
    %160 = vst [vmem:[#allocation7] sm:$0xff] %v152
    %161 = vst [vmem:[#allocation7 + $0x8] sm:$0xff] %v153
    %162 = vst [vmem:[#allocation7 + $0x10] sm:$0xff] %v154
    %163 = vst [vmem:[#allocation7 + $0x18] sm:$0xff] %v155
    %164 = vst [vmem:[#allocation7 + $0x20] sm:$0xff] %v156
    %165 = vst [vmem:[#allocation7 + $0x28] sm:$0xff] %v157
    %166 = vst [vmem:[#allocation7 + $0x30] sm:$0xff] %v158
    %167 = vst [vmem:[#allocation7 + $0x38] sm:$0xff] %v159
    // Predicated region
    $region18: #{tpu_custom_call.1} parent=1 // pred_check
      _
    $region19: #{tpu_custom_call.1} parent=1 // pred_check_branch
      %169 = sbr.rel (0) target = $region21
    $region20: #{tpu_custom_call.1} parent=1 // pred_region
      %s171 = ssub.s32 1024, 1024
      %172 = vsyncadd [#allocation4], %s171
      %s173 = sshll.u32 [#allocation7], 4
      %s174 = int_to_ptr.vmem [resolvable:$true] %s173
      %179 = dma.vmem_to_hbm [thread:$0]  %s174, 1024, %s2, [#allocation4], 512, 512, 32
    $region21: #{tpu_custom_call.1} parent=1 // pred_fallthru
      _
    // Predicated region
    $region22: #{tpu_custom_call.1} parent=1 // pred_check
      _
    $region23: #{tpu_custom_call.1} parent=1 // pred_check_branch
      %181 = sbr.rel (0) target = $region25
    $region24: #{tpu_custom_call.1} parent=1 // pred_region
      %182 = dma.done [#allocation4], 1024
    $region25: #{tpu_custom_call.1} parent=1 // pred_fallthru
      _
    %183 = vsyncpa [#allocation3], 1
    %184 = vsyncpa [#allocation6], 1
    %185 = vsyncpa [#allocation4], 1

</llo_original>
